<compile_context>
chip_gen: v7x
topology: tpu7x:2x2x1
jax: 0.10.0
libtpu: 0.0.40
codegen_flags: <defaults>
</compile_context>

<pallas_src>
import functools

import numpy as np
import jax
import jax.numpy as jnp
from jax import lax
from jax.experimental import pallas as pl
from jax.experimental.pallas import tpu as pltpu


# ---- fixed geometry implied by the module (8x8x3 input) --------------------
IN_C, IN_H, IN_W = 3, 8, 8
K_IN = IN_C * IN_H * IN_W      # 192 : NCHW-flattened input per sample
H1 = 256                       # conv1 flat output 16*3*3 = 144, padded to 256
H2 = 128                       # conv2 flat output 16*2*2 = 64,  padded to 128
H3 = 128                       # head hidden: q-hidden lanes 0:64 | i-hidden 64:128
NO = 128                       # merged lane-dense output slab
N_ACT = 3                      # number of actions
Q_OFF, LP_OFF, I_OFF = 0, 32, 64   # lane offsets of q / log_softmax(i) / i


def _round_up(x, m):
    return (x + m - 1) // m * m


# ---------------- fused Pallas kernel ----------------------------------------

def _fused_kernel(x_ref, t1_ref, t2_ref, wh_ref, wd_ref, b_ref, o_ref):
    f32 = jnp.float32
    bf16 = jnp.bfloat16

    b = b_ref[...]                       # (8, 256) f32 packed bias block
    b1 = b[0:1, :]                       # (1, 256) conv1 bias (Toeplitz layout)
    b2 = b[1:2, :H2]                     # (1, 128) conv2 bias
    bh = b[2:3, :H3]                     # (1, 128) fused q1|i1 bias
    bd = b[3:4, :NO]                     # (1, 128) fused head bias

    x = x_ref[...]                                                   # (tb, 192) bf16
    # conv1 + relu (Toeplitz form, lane-padded to 256), bf16 MXU / f32 acc
    h = jnp.maximum(
        jnp.dot(x, t1_ref[...], preferred_element_type=f32) + b1, 0.0).astype(bf16)
    # conv2 + relu (Toeplitz form, lane-padded to 128)
    h = jnp.maximum(
        jnp.dot(h, t2_ref[...], preferred_element_type=f32) + b2, 0.0).astype(bf16)
    # fused q1|i1 + relu -> lanes 0:64 = q-hidden, 64:128 = i-hidden
    h = jnp.maximum(
        jnp.dot(h, wh_ref[...], preferred_element_type=f32) + bh, 0.0).astype(bf16)
    # fused head: lanes 0:3 = q, lanes 32:35 = i (copy), lanes 64:67 = i
    head = jnp.dot(h, wd_ref[...], preferred_element_type=f32) + bd   # (tb, 128) f32

    # masked, numerically stable log_softmax computed in place on lanes 32:35
    col = lax.broadcasted_iota(jnp.int32, head.shape, 1)
    lsm = (col >= LP_OFF) & (col < LP_OFF + N_ACT)
    masked = jnp.where(lsm, head, -jnp.inf)            # -inf BEFORE exp: no overflow
    m = jnp.max(masked, axis=1, keepdims=True)
    s = masked - m
    lse = jnp.log(jnp.sum(jnp.exp(s), axis=1, keepdims=True))
    o_ref[...] = jnp.where(lsm, s - lse, head)


# ---------------- wrapper -----------------------------------------------------

def bcq_conv_forward(state, fp, *, tile_b=1024):
    """state: (B, 3, 8, 8) f32, fp: packed params from prepare_fused_params."""
    B = state.shape[0]
    x = state.reshape(B, K_IN).astype(jnp.bfloat16)    # NCHW flatten + bf16 cast

    # right-size the batch tile: minimize padding, keep rows a multiple of 16
    # (bf16 sublane packing), and prefer >=2 grid steps (v7x megacore) when
    # the batch is big enough.
    num_tiles = max(1, -(-B // tile_b))
    if num_tiles == 1 and B > 16:
        num_tiles = 2
    tb = _round_up(-(-B // num_tiles), 16)
    b_pad = tb * num_tiles
    if b_pad != B:
        x = jnp.pad(x, ((0, b_pad - B), (0, 0)))
    grid = (num_tiles,)

    weight_args = (fp['t1'], fp['t2'], fp['wh'], fp['wd'], fp['b'])
    w_specs = [pl.BlockSpec(w.shape, lambda g: (0, 0)) for w in weight_args]

    flops = 2 * b_pad * (K_IN * H1 + H1 * H2 + H2 * H3 + H3 * NO)
    weight_bytes = sum(int(np.prod(w.shape)) * w.dtype.itemsize for w in weight_args)
    cost = pl.CostEstimate(
        flops=flops,
        transcendentals=b_pad * (NO + 1),
        bytes_accessed=2 * b_pad * K_IN + weight_bytes + 4 * b_pad * NO)

    out = pl.pallas_call(
        _fused_kernel,
        out_shape=jax.ShapeDtypeStruct((b_pad, NO), jnp.float32),
        grid=grid,
        in_specs=[pl.BlockSpec((tb, K_IN), lambda g: (g, 0))] + w_specs,
        out_specs=pl.BlockSpec((tb, NO), lambda g: (g, 0)),
        compiler_params=pltpu.CompilerParams(
            dimension_semantics=("parallel",),
            vmem_limit_bytes=48 * 1024 * 1024),   # v5e default is only 16 MiB
        cost_estimate=cost,
    )(x, *weight_args)

    # free wrapper-side slicing back to the PyTorch output shapes
    q = out[:B, Q_OFF:Q_OFF + N_ACT]
    log_probs = out[:B, LP_OFF:LP_OFF + N_ACT]
    i = out[:B, I_OFF:I_OFF + N_ACT]
    return q, log_probs, i


# ---------------- one-time parameter packing ----------------------------------

def _conv_toeplitz(w, in_shape, stride):
    """Dense T of shape (Cin*H*W, Cout*Ho*Wo) with x_flat @ T == conv2d(x) flat
    (NCHW flattening order, identical to PyTorch)."""
    Cout, Cin, kh, kw = w.shape
    _, H, W = in_shape
    Ho = (H - kh) // stride + 1
    Wo = (W - kw) // stride + 1
    wn = np.asarray(w, np.float32)
    T = np.zeros((Cin * H * W, Cout * Ho * Wo), np.float32)
    for co in range(Cout):
        for ci in range(Cin):
            for i in range(kh):
                for j in range(kw):
                    for oh in range(Ho):
                        for ow in range(Wo):
                            r = ci * H * W + (oh * stride + i) * W + (ow * stride + j)
                            c = co * Ho * Wo + oh * Wo + ow
                            T[r, c] += wn[co, ci, i, j]
    return T, Ho, Wo


def prepare_fused_params(p):
    """Fold convs into lane-padded Toeplitz matmuls, fuse/pack the heads and
    biases, cast matrices to bf16.  Done ONCE at init; off the hot path."""
    t1_raw, ho1, wo1 = _conv_toeplitz(p['c1_w'], (IN_C, IN_H, IN_W), 2)  # (192,144)
    n1 = t1_raw.shape[1]
    t2_raw, ho2, wo2 = _conv_toeplitz(p['c2_w'], (16, ho1, wo1), 1)      # (144,64)
    n2 = t2_raw.shape[1]

    t1 = np.zeros((K_IN, H1), np.float32); t1[:, :n1] = t1_raw
    t2 = np.zeros((H1, H2), np.float32);   t2[:n1, :n2] = t2_raw

    wh = np.zeros((H2, H3), np.float32)
    wh[:64, :64] = np.asarray(p['q1_w'], np.float32)
    wh[:64, 64:128] = np.asarray(p['i1_w'], np.float32)

    # fused head: q2 -> lanes 0:3 (fed by q-hidden rows 0:64),
    # i2 duplicated into lanes 32:35 (for in-place log_softmax) and 64:67 (raw i)
    wd = np.zeros((H3, NO), np.float32)
    wd[:64, Q_OFF:Q_OFF + N_ACT] = np.asarray(p['q2_w'], np.float32)
    wd[64:128, LP_OFF:LP_OFF + N_ACT] = np.asarray(p['i2_w'], np.float32)
    wd[64:128, I_OFF:I_OFF + N_ACT] = np.asarray(p['i2_w'], np.float32)

    # packed bias block (f32 for exact bias adds); padded lanes are exact zeros
    b = np.zeros((8, H1), np.float32)
    b[0, :n1] = np.repeat(np.asarray(p['c1_b'], np.float32), ho1 * wo1)
    b[1, :n2] = np.repeat(np.asarray(p['c2_b'], np.float32), ho2 * wo2)
    b[2, :64] = np.asarray(p['q1_b'], np.float32)
    b[2, 64:128] = np.asarray(p['i1_b'], np.float32)
    b[3, Q_OFF:Q_OFF + N_ACT] = np.asarray(p['q2_b'], np.float32)
    b[3, LP_OFF:LP_OFF + N_ACT] = np.asarray(p['i2_b'], np.float32)
    b[3, I_OFF:I_OFF + N_ACT] = np.asarray(p['i2_b'], np.float32)

    return dict(
        t1=jnp.asarray(t1, jnp.bfloat16),
        t2=jnp.asarray(t2, jnp.bfloat16),
        wh=jnp.asarray(wh, jnp.bfloat16),
        wd=jnp.asarray(wd, jnp.bfloat16),
        b=jnp.asarray(b, jnp.float32),
    )


def init_params(key):
    """PyTorch-default-style uniform(-1/sqrt(fan_in), 1/sqrt(fan_in)) init."""
    ks = jax.random.split(key, 12)

    def u(k, shape, fan_in):
        bound = 1.0 / float(fan_in) ** 0.5
        return jax.random.uniform(k, shape, jnp.float32, -bound, bound)

    p = {}
    p['c1_w'] = u(ks[0], (16, 3, 3, 3), 3 * 3 * 3)
    p['c1_b'] = u(ks[1], (16,), 3 * 3 * 3)
    p['c2_w'] = u(ks[2], (16, 16, 2, 2), 16 * 2 * 2)
    p['c2_b'] = u(ks[3], (16,), 16 * 2 * 2)
    # Linear weights stored as (in, out) so the kernel computes x @ W directly.
    p['q1_w'] = u(ks[4], (64, 64), 64)
    p['q1_b'] = u(ks[5], (64,), 64)
    p['q2_w'] = u(ks[6], (64, 3), 64)
    p['q2_b'] = u(ks[7], (3,), 64)
    p['i1_w'] = u(ks[8], (64, 64), 64)
    p['i1_b'] = u(ks[9], (64,), 64)
    p['i2_w'] = u(ks[10], (64, 3), 64)
    p['i2_b'] = u(ks[11], (3,), 64)
    return p


# ---------------- plain-XLA reference of the PyTorch graph (for checking) -----

def reference_forward(state, p):
    x = lax.conv(state, p['c1_w'], (2, 2), 'VALID') + p['c1_b'][None, :, None, None]
    x = jnp.maximum(x, 0.0)
    x = lax.conv(x, p['c2_w'], (1, 1), 'VALID') + p['c2_b'][None, :, None, None]
    x = jnp.maximum(x, 0.0)
    c = x.reshape(-1, 64)
    q = jnp.maximum(c @ p['q1_w'] + p['q1_b'], 0.0)
    qo = q @ p['q2_w'] + p['q2_b']
    ih = jnp.maximum(c @ p['i1_w'] + p['i1_b'], 0.0)
    io = ih @ p['i2_w'] + p['i2_b']
    return qo, jax.nn.log_softmax(io, axis=1), io


if __name__ == "__main__":
    key = jax.random.PRNGKey(0)
    pkey, xkey = jax.random.split(key)
    params = init_params(pkey)
    fused = prepare_fused_params(params)        # one-time packing (off hot path)

    state = jax.random.normal(xkey, (2, IN_C, IN_H, IN_W), jnp.float32)

    fwd = jax.jit(functools.partial(bcq_conv_forward, tile_b=1024))
    q_val, log_probs, i_val = jax.block_until_ready(fwd(state, fused))

    assert q_val.shape == (2, 3)
    assert log_probs.shape == (2, 3)
    assert i_val.shape == (2, 3)

    # Correctness vs a plain-XLA replica of the original PyTorch module.
    # Tolerances relaxed for the bf16 weight/activation path (f32 accumulation).
    q_ref, lp_ref, i_ref = reference_forward(state, params)
    assert jnp.allclose(q_val, q_ref, rtol=5e-2, atol=5e-2)
    assert jnp.allclose(log_probs, lp_ref, rtol=5e-2, atol=5e-2)
    assert jnp.allclose(i_val, i_ref, rtol=5e-2, atol=5e-2)
    # log_softmax internal consistency: rows exp-sum to ~1 (computed in f32)
    assert jnp.allclose(jnp.sum(jnp.exp(log_probs), axis=1), 1.0, atol=1e-4)

    print("KERNEL_OK")
</pallas_src>

<mosaic_0001>
module attributes {stable_mosaic.version = 11 : i64} {
  func.func @_fused_kernel(%arg0: i32, %arg1: memref<16x192xbf16, #tpu.memory_space<vmem>>, %arg2: memref<192x256xbf16, #tpu.memory_space<vmem>>, %arg3: memref<256x128xbf16, #tpu.memory_space<vmem>>, %arg4: memref<128x128xbf16, #tpu.memory_space<vmem>>, %arg5: memref<128x128xbf16, #tpu.memory_space<vmem>>, %arg6: memref<8x256xf32, #tpu.memory_space<vmem>>, %arg7: memref<16x128xf32, #tpu.memory_space<vmem>>) attributes {dimension_semantics = [#tpu.dimension_semantics<parallel>], iteration_bounds = array<i64: 1>, scalar_prefetch = 0 : i64, scratch_operands = 0 : i64, tpu.core_type = #tpu.core_type<tc>, window_params = [{transform_indices = @transform_0, window_bounds = array<i64: 16, 192>}, {pipeline_mode = #tpu.pipeline_mode<synchronous>, transform_indices = @transform_1, window_bounds = array<i64: 192, 256>}, {pipeline_mode = #tpu.pipeline_mode<synchronous>, transform_indices = @transform_2, window_bounds = array<i64: 256, 128>}, {pipeline_mode = #tpu.pipeline_mode<synchronous>, transform_indices = @transform_3, window_bounds = array<i64: 128, 128>}, {pipeline_mode = #tpu.pipeline_mode<synchronous>, transform_indices = @transform_4, window_bounds = array<i64: 128, 128>}, {pipeline_mode = #tpu.pipeline_mode<synchronous>, transform_indices = @transform_5, window_bounds = array<i64: 8, 256>}, {transform_indices = @transform_6, window_bounds = array<i64: 16, 128>}]} {
    %c0 = arith.constant 0 : index
    %c0_0 = arith.constant 0 : index
    %0 = vector.load %arg6[%c0, %c0_0] : memref<8x256xf32, #tpu.memory_space<vmem>>, vector<8x256xf32>
    %1 = vector.extract_strided_slice %0 {offsets = [0, 0], sizes = [1, 256], strides = [1, 1]} : vector<8x256xf32> to vector<1x256xf32>
    %2 = vector.extract_strided_slice %0 {offsets = [1, 0], sizes = [1, 128], strides = [1, 1]} : vector<8x256xf32> to vector<1x128xf32>
    %3 = vector.extract_strided_slice %0 {offsets = [2, 0], sizes = [1, 128], strides = [1, 1]} : vector<8x256xf32> to vector<1x128xf32>
    %4 = vector.extract_strided_slice %0 {offsets = [3, 0], sizes = [1, 128], strides = [1, 1]} : vector<8x256xf32> to vector<1x128xf32>
    %c0_1 = arith.constant 0 : index
    %c0_2 = arith.constant 0 : index
    %5 = vector.load %arg1[%c0_1, %c0_2] : memref<16x192xbf16, #tpu.memory_space<vmem>>, vector<16x192xbf16>
    %c0_3 = arith.constant 0 : index
    %c0_4 = arith.constant 0 : index
    %6 = vector.load %arg2[%c0_3, %c0_4] : memref<192x256xbf16, #tpu.memory_space<vmem>>, vector<192x256xbf16>
    %cst = arith.constant dense<0.000000e+00> : vector<16x256xf32>
    %7 = tpu.matmul %5, %6, %cst {dimension_numbers = #tpu.dot_dimension_numbers<[1], [0], [0], [1], [0, 0, 1, 1], [], []>} : vector<16x192xbf16>, vector<192x256xbf16>, vector<16x256xf32> -> vector<16x256xf32>
    %8 = vector.broadcast %1 : vector<1x256xf32> to vector<16x256xf32>
    %9 = arith.addf %7, %8 : vector<16x256xf32>
    %cst_5 = arith.constant 0.000000e+00 : f32
    %10 = vector.broadcast %cst_5 : f32 to vector<16x256xf32>
    %11 = arith.maximumf %9, %10 : vector<16x256xf32>
    %12 = arith.truncf %11 : vector<16x256xf32> to vector<16x256xbf16>
    %c0_6 = arith.constant 0 : index
    %c0_7 = arith.constant 0 : index
    %13 = vector.load %arg3[%c0_6, %c0_7] : memref<256x128xbf16, #tpu.memory_space<vmem>>, vector<256x128xbf16>
    %cst_8 = arith.constant dense<0.000000e+00> : vector<16x128xf32>
    %14 = tpu.matmul %12, %13, %cst_8 {dimension_numbers = #tpu.dot_dimension_numbers<[1], [0], [0], [1], [0, 0, 1, 1], [], []>} : vector<16x256xbf16>, vector<256x128xbf16>, vector<16x128xf32> -> vector<16x128xf32>
    %15 = vector.broadcast %2 : vector<1x128xf32> to vector<16x128xf32>
    %16 = arith.addf %14, %15 : vector<16x128xf32>
    %cst_9 = arith.constant 0.000000e+00 : f32
    %17 = vector.broadcast %cst_9 : f32 to vector<16x128xf32>
    %18 = arith.maximumf %16, %17 : vector<16x128xf32>
    %19 = arith.truncf %18 : vector<16x128xf32> to vector<16x128xbf16>
    %c0_10 = arith.constant 0 : index
    %c0_11 = arith.constant 0 : index
    %20 = vector.load %arg4[%c0_10, %c0_11] : memref<128x128xbf16, #tpu.memory_space<vmem>>, vector<128x128xbf16>
    %cst_12 = arith.constant dense<0.000000e+00> : vector<16x128xf32>
    %21 = tpu.matmul %19, %20, %cst_12 {dimension_numbers = #tpu.dot_dimension_numbers<[1], [0], [0], [1], [0, 0, 1, 1], [], []>} : vector<16x128xbf16>, vector<128x128xbf16>, vector<16x128xf32> -> vector<16x128xf32>
    %22 = vector.broadcast %3 : vector<1x128xf32> to vector<16x128xf32>
    %23 = arith.addf %21, %22 : vector<16x128xf32>
    %cst_13 = arith.constant 0.000000e+00 : f32
    %24 = vector.broadcast %cst_13 : f32 to vector<16x128xf32>
    %25 = arith.maximumf %23, %24 : vector<16x128xf32>
    %26 = arith.truncf %25 : vector<16x128xf32> to vector<16x128xbf16>
    %c0_14 = arith.constant 0 : index
    %c0_15 = arith.constant 0 : index
    %27 = vector.load %arg5[%c0_14, %c0_15] : memref<128x128xbf16, #tpu.memory_space<vmem>>, vector<128x128xbf16>
    %cst_16 = arith.constant dense<0.000000e+00> : vector<16x128xf32>
    %28 = tpu.matmul %26, %27, %cst_16 {dimension_numbers = #tpu.dot_dimension_numbers<[1], [0], [0], [1], [0, 0, 1, 1], [], []>} : vector<16x128xbf16>, vector<128x128xbf16>, vector<16x128xf32> -> vector<16x128xf32>
    %29 = vector.broadcast %4 : vector<1x128xf32> to vector<16x128xf32>
    %30 = arith.addf %28, %29 : vector<16x128xf32>
    %31 = tpu.iota {dimensions = array<i32: 1>} : vector<16x128xi32>
    %c32_i32 = arith.constant 32 : i32
    %32 = vector.broadcast %c32_i32 : i32 to vector<16x128xi32>
    %33 = arith.cmpi sge, %31, %32 : vector<16x128xi32>
    %c35_i32 = arith.constant 35 : i32
    %34 = vector.broadcast %c35_i32 : i32 to vector<16x128xi32>
    %35 = arith.cmpi slt, %31, %34 : vector<16x128xi32>
    %36 = arith.andi %33, %35 : vector<16x128xi1>
    %cst_17 = arith.constant 0xFF800000 : f32
    %37 = vector.broadcast %cst_17 : f32 to vector<16x128xf32>
    %38 = arith.select %36, %30, %37 : vector<16x128xi1>, vector<16x128xf32>
    %cst_18 = arith.constant dense<0xFF800000> : vector<16xf32>
    %39 = vector.multi_reduction <maximumf>, %38, %cst_18 [1] : vector<16x128xf32> to vector<16xf32>
    %40 = vector.shape_cast %39 : vector<16xf32> to vector<16x1xf32>
    %41 = vector.broadcast %40 : vector<16x1xf32> to vector<16x128xf32>
    %42 = arith.subf %38, %41 : vector<16x128xf32>
    %43 = math.exp %42 : vector<16x128xf32>
    %cst_19 = arith.constant dense<0.000000e+00> : vector<16xf32>
    %44 = vector.multi_reduction <add>, %43, %cst_19 [1] : vector<16x128xf32> to vector<16xf32>
    %45 = vector.shape_cast %44 : vector<16xf32> to vector<16x1xf32>
    %46 = math.log %45 : vector<16x1xf32>
    %47 = vector.broadcast %46 : vector<16x1xf32> to vector<16x128xf32>
    %48 = arith.subf %42, %47 : vector<16x128xf32>
    %49 = arith.select %36, %48, %30 : vector<16x128xi1>, vector<16x128xf32>
    %c0_20 = arith.constant 0 : index
    %c0_21 = arith.constant 0 : index
    %50 = vector.load %arg7[%c0_20, %c0_21] : memref<16x128xf32, #tpu.memory_space<vmem>>, vector<16x128xf32>
    tpu.vector_store %arg7[%c0_20, %c0_21], %49 {strides = array<i32>} : memref<16x128xf32, #tpu.memory_space<vmem>>, vector<16x128xf32>,
    return
  }
  func.func @transform_0(%arg0: i32) -> (i32, i32) {
    %c0_i32 = arith.constant 0 : i32
    %c0_i32_0 = arith.constant 0 : i32
    return %arg0, %c0_i32 : i32, i32
  }
  func.func @transform_1(%arg0: i32) -> (i32, i32) {
    %c0_i32 = arith.constant 0 : i32
    %c0_i32_0 = arith.constant 0 : i32
    %c0_i32_1 = arith.constant 0 : i32
    return %c0_i32, %c0_i32_0 : i32, i32
  }
  func.func @transform_2(%arg0: i32) -> (i32, i32) {
    %c0_i32 = arith.constant 0 : i32
    %c0_i32_0 = arith.constant 0 : i32
    %c0_i32_1 = arith.constant 0 : i32
    return %c0_i32, %c0_i32_0 : i32, i32
  }
  func.func @transform_3(%arg0: i32) -> (i32, i32) {
    %c0_i32 = arith.constant 0 : i32
    %c0_i32_0 = arith.constant 0 : i32
    %c0_i32_1 = arith.constant 0 : i32
    return %c0_i32, %c0_i32_0 : i32, i32
  }
  func.func @transform_4(%arg0: i32) -> (i32, i32) {
    %c0_i32 = arith.constant 0 : i32
    %c0_i32_0 = arith.constant 0 : i32
    %c0_i32_1 = arith.constant 0 : i32
    return %c0_i32, %c0_i32_0 : i32, i32
  }
  func.func @transform_5(%arg0: i32) -> (i32, i32) {
    %c0_i32 = arith.constant 0 : i32
    %c0_i32_0 = arith.constant 0 : i32
    %c0_i32_1 = arith.constant 0 : i32
    return %c0_i32, %c0_i32_0 : i32, i32
  }
  func.func @transform_6(%arg0: i32) -> (i32, i32) {
    %c0_i32 = arith.constant 0 : i32
    %c0_i32_0 = arith.constant 0 : i32
    return %arg0, %c0_i32 : i32, i32
  }
}

</mosaic_0001>

<llo_original>
// kernel: bcq_conv_forward.1
$region0: #{bcq_conv_forward.1}
  #allocation0 [shape = 'u32[]', space=smem, size = 0x4, offset = 0x4, fixed_abs, tag = 'smem constant byte address 0x4 - core index']
  #allocation1 [shape = 'u32[144,128]{1,0:T(1,128)}', space=vmem, size = 0x12000, scoped, tag = 'internal scratch']
  %s0 = inlined_call_operand.vmem [shape: bf16[16,192], index: 0, kind: input, shape index: {}]
  %s1 = inlined_call_operand.hbm [shape: bf16[192,256], index: 1, kind: input, shape index: {}]
  %s2 = inlined_call_operand.vmem [shape: bf16[256,128], index: 2, kind: input, shape index: {}]
  %s3 = inlined_call_operand.hbm [shape: bf16[128,128], index: 3, kind: input, shape index: {}]
  %s4 = inlined_call_operand.hbm [shape: bf16[128,128], index: 4, kind: input, shape index: {}]
  %s5 = inlined_call_operand.hbm [shape: f32[8,256], index: 5, kind: input, shape index: {}]
  %s6 = inlined_call_operand.vmem [shape: f32[16,128], index: 6, kind: output, shape index: {}]
  %s7 = sld [smem:[#allocation0]]
  $region50: #{bcq_conv_forward.1} parent=0
    _
  %s9 = ssub.s32 1, %s7
  %s10 = scalar_select 0, %s9, %s7
  $region1: #{bcq_conv_forward.1} parent=0
    #allocation2 [shape = 'u8[98304]{0}', space=vmem, size = 0x18000, scoped, tag = 'input window, operand 1, single buffered']
    #allocation3 [shape = 's32[1]{0}', space=sflag, size = 0x4, scoped, tag = 'scoped memory for bcq_conv_forward.1']
    #allocation4 [shape = 'u8[32768]{0}', space=vmem, size = 0x8000, scoped, tag = 'input window, operand 3, single buffered']
    #allocation5 [shape = 's32[1]{0}', space=sflag, size = 0x4, scoped, tag = 'scoped memory for bcq_conv_forward.1']
    #allocation6 [shape = 'u8[32768]{0}', space=vmem, size = 0x8000, scoped, tag = 'input window, operand 4, single buffered']
    #allocation7 [shape = 'u8[8192]{0}', space=vmem, size = 0x2000, scoped, tag = 'input window, operand 5, single buffered']
    #allocation8 [shape = 's32[1]{0}', space=sflag, size = 0x4, scoped, tag = 'scoped memory for bcq_conv_forward.1']
    %11 = vsyncpa [#allocation3], 0
    %12 = vsyncpa [#allocation5], 0
    %13 = vsyncpa [#allocation8], 0
    // Predicated region
    $region2: #{bcq_conv_forward.1} parent=1 // pred_check
      _
    $region3: #{bcq_conv_forward.1} parent=1 // pred_check_branch
      %15 = sbr.rel (0) target = $region5
    $region4: #{bcq_conv_forward.1} parent=1 // pred_region
      _
    $region5: #{bcq_conv_forward.1} parent=1 // pred_fallthru
      _
    // Predicated region
    $region6: #{bcq_conv_forward.1} parent=1 // pred_check
      _
    $region7: #{bcq_conv_forward.1} parent=1 // pred_check_branch
      %17 = sbr.rel (0) target = $region9
    $region8: #{bcq_conv_forward.1} parent=1 // pred_region
      %s19 = ssub.s32 3072, 3072
      %20 = vsyncadd [#allocation3], %s19
      %s21 = sshll.u32 [#allocation2], 4
      %s22 = int_to_ptr.vmem [resolvable:$true] %s21
      %27 = dma.hbm_to_vmem [thread:$0]  %s1, 3072, %s22, [#allocation3], 128, 128, 8
    $region9: #{bcq_conv_forward.1} parent=1 // pred_fallthru
      _
    // Predicated region
    $region10: #{bcq_conv_forward.1} parent=1 // pred_check
      _
    $region11: #{bcq_conv_forward.1} parent=1 // pred_check_branch
      %29 = sbr.rel (0) target = $region13
    $region12: #{bcq_conv_forward.1} parent=1 // pred_region
      _
    $region13: #{bcq_conv_forward.1} parent=1 // pred_fallthru
      _
    // Predicated region
    $region14: #{bcq_conv_forward.1} parent=1 // pred_check
      _
    $region15: #{bcq_conv_forward.1} parent=1 // pred_check_branch
      %31 = sbr.rel (0) target = $region17
    $region16: #{bcq_conv_forward.1} parent=1 // pred_region
      %s33 = ssub.s32 1024, 1024
      %34 = vsyncadd [#allocation5], %s33
      %s35 = sshll.u32 [#allocation4], 4
      %s36 = int_to_ptr.vmem [resolvable:$true] %s35
      %41 = dma.hbm_to_vmem [thread:$0]  %s3, 1024, %s36, [#allocation5], 64, 64, 4
    $region17: #{bcq_conv_forward.1} parent=1 // pred_fallthru
      _
    // Predicated region
    $region18: #{bcq_conv_forward.1} parent=1 // pred_check
      _
    $region19: #{bcq_conv_forward.1} parent=1 // pred_check_branch
      %43 = sbr.rel (0) target = $region21
    $region20: #{bcq_conv_forward.1} parent=1 // pred_region
      %s45 = ssub.s32 1024, 1024
      %46 = vsyncadd [#allocation5], %s45
      %s47 = sshll.u32 [#allocation6], 4
      %s48 = int_to_ptr.vmem [resolvable:$true] %s47
      %53 = dma.hbm_to_vmem [thread:$0]  %s4, 1024, %s48, [#allocation5], 64, 64, 4
    $region21: #{bcq_conv_forward.1} parent=1 // pred_fallthru
      _
    // Predicated region
    $region22: #{bcq_conv_forward.1} parent=1 // pred_check
      _
    $region23: #{bcq_conv_forward.1} parent=1 // pred_check_branch
      %55 = sbr.rel (0) target = $region25
    $region24: #{bcq_conv_forward.1} parent=1 // pred_region
      %s57 = ssub.s32 256, 256
      %58 = vsyncadd [#allocation8], %s57
      %s60 = sshll.u32 [#allocation7], 4
      %s61 = int_to_ptr.vmem [resolvable:$true] %s60
      %63 = dma.hbm_to_vmem [thread:$0]  %s5, 256, %s61, [#allocation8]
    $region25: #{bcq_conv_forward.1} parent=1 // pred_fallthru
      _
    // Predicated region
    $region26: #{bcq_conv_forward.1} parent=1 // pred_check
      _
    $region27: #{bcq_conv_forward.1} parent=1 // pred_check_branch
      %65 = sbr.rel (0) target = $region29
    $region28: #{bcq_conv_forward.1} parent=1 // pred_region
      %66 = dma.done [#allocation3], 3072
    $region29: #{bcq_conv_forward.1} parent=1 // pred_fallthru
      _
    // Predicated region
    $region30: #{bcq_conv_forward.1} parent=1 // pred_check
      _
    $region31: #{bcq_conv_forward.1} parent=1 // pred_check_branch
      %68 = sbr.rel (0) target = $region33
    $region32: #{bcq_conv_forward.1} parent=1 // pred_region
      %69 = dma.done [#allocation5], 1024
    $region33: #{bcq_conv_forward.1} parent=1 // pred_fallthru
      _
    // Predicated region
    $region34: #{bcq_conv_forward.1} parent=1 // pred_check
      _
    $region35: #{bcq_conv_forward.1} parent=1 // pred_check_branch
      %71 = sbr.rel (0) target = $region37
    $region36: #{bcq_conv_forward.1} parent=1 // pred_region
      %72 = dma.done [#allocation5], 1024
    $region37: #{bcq_conv_forward.1} parent=1 // pred_fallthru
      _
    // Predicated region
    $region38: #{bcq_conv_forward.1} parent=1 // pred_check
      _
    $region39: #{bcq_conv_forward.1} parent=1 // pred_check_branch
      %74 = sbr.rel (0) target = $region41
    $region40: #{bcq_conv_forward.1} parent=1 // pred_region
      %75 = dma.done [#allocation8], 256
    $region41: #{bcq_conv_forward.1} parent=1 // pred_fallthru
      _
    %v77 = vld [vmem:[#allocation7] sm:$0xff]
    %v78 = vld [vmem:[#allocation7 + $0x8] sm:$0xff]
    %v79 = vld [vmem:[%s0] sm:$0xff]
    %v80 = vld [vmem:[%s0 + $0x8] sm:$0xff]
    %v81 = vld [vmem:[#allocation2] sm:$0xff]
    %v82 = vld [vmem:[#allocation2 + $0x8] sm:$0xff]
    %v83 = vld [vmem:[#allocation2 + $0x10] sm:$0xff]
    %v84 = vld [vmem:[#allocation2 + $0x18] sm:$0xff]
    %v85 = vld [vmem:[#allocation2 + $0x20] sm:$0xff]
    %v86 = vld [vmem:[#allocation2 + $0x28] sm:$0xff]
    %v87 = vld [vmem:[#allocation2 + $0x30] sm:$0xff]
    %v88 = vld [vmem:[#allocation2 + $0x38] sm:$0xff]
    %v89 = vld [vmem:[#allocation2 + $0x40] sm:$0xff]
    %v90 = vld [vmem:[#allocation2 + $0x48] sm:$0xff]
    %v91 = vld [vmem:[#allocation2 + $0x50] sm:$0xff]
    %v92 = vld [vmem:[#allocation2 + $0x58] sm:$0xff]
    %v93 = vld [vmem:[#allocation2 + $0x60] sm:$0xff]
    %v94 = vld [vmem:[#allocation2 + $0x68] sm:$0xff]
    %v95 = vld [vmem:[#allocation2 + $0x70] sm:$0xff]
    %v96 = vld [vmem:[#allocation2 + $0x78] sm:$0xff]
    %v97 = vld [vmem:[#allocation2 + $0x80] sm:$0xff]
    %v98 = vld [vmem:[#allocation2 + $0x88] sm:$0xff]
    %v99 = vld [vmem:[#allocation2 + $0x90] sm:$0xff]
    %v100 = vld [vmem:[#allocation2 + $0x98] sm:$0xff]
    %v101 = vld [vmem:[#allocation2 + $0xa0] sm:$0xff]
    %v102 = vld [vmem:[#allocation2 + $0xa8] sm:$0xff]
    %v103 = vld [vmem:[#allocation2 + $0xb0] sm:$0xff]
    %v104 = vld [vmem:[#allocation2 + $0xb8] sm:$0xff]
    %v105 = vlaneseq
    %v106 = vshrl.u32 %v105, 7
    %v107 = vsub.s32 0, %v106
    %v108 = vrot.slane %v77, %v107
    %v109 = vlaneseq
    %v110 = vshrl.u32 %v109, 7
    %v111 = vsub.s32 0, %v110
    %v112 = vrot.slane %v78, %v111
    %v115 = vunpack.c.l.b16 %v79
    %v116 = vunpack.c.h.b16 %v79
    %v117 = vunpack.c.l.b16 %v80
    %v118 = vunpack.c.h.b16 %v80
    %v119 = vpack.c.b16 %v117, %v115
    %v120 = vpack.c.b16 %v118, %v116
    %v146 = vunpack.c.l.b16 %v81
    %v147 = vunpack.c.h.b16 %v81
    %v148 = vunpack.c.l.b16 %v82
    %v149 = vunpack.c.h.b16 %v82
    %v150 = vunpack.c.l.b16 %v83
    %v151 = vunpack.c.h.b16 %v83
    %v152 = vunpack.c.l.b16 %v84
    %v153 = vunpack.c.h.b16 %v84
    %v154 = vunpack.c.l.b16 %v85
    %v155 = vunpack.c.h.b16 %v85
    %v156 = vunpack.c.l.b16 %v86
    %v157 = vunpack.c.h.b16 %v86
    %v158 = vunpack.c.l.b16 %v87
    %v159 = vunpack.c.h.b16 %v87
    %v160 = vunpack.c.l.b16 %v88
    %v161 = vunpack.c.h.b16 %v88
    %v162 = vunpack.c.l.b16 %v89
    %v163 = vunpack.c.h.b16 %v89
    %v164 = vunpack.c.l.b16 %v90
    %v165 = vunpack.c.h.b16 %v90
    %v166 = vunpack.c.l.b16 %v91
    %v167 = vunpack.c.h.b16 %v91
    %v168 = vunpack.c.l.b16 %v92
    %v169 = vunpack.c.h.b16 %v92
    %v170 = vunpack.c.l.b16 %v93
    %v171 = vunpack.c.h.b16 %v93
    %v172 = vunpack.c.l.b16 %v94
    %v173 = vunpack.c.h.b16 %v94
    %v174 = vunpack.c.l.b16 %v95
    %v175 = vunpack.c.h.b16 %v95
    %v176 = vunpack.c.l.b16 %v96
    %v177 = vunpack.c.h.b16 %v96
    %v178 = vunpack.c.l.b16 %v97
    %v179 = vunpack.c.h.b16 %v97
    %v180 = vunpack.c.l.b16 %v98
    %v181 = vunpack.c.h.b16 %v98
    %v182 = vunpack.c.l.b16 %v99
    %v183 = vunpack.c.h.b16 %v99
    %v184 = vunpack.c.l.b16 %v100
    %v185 = vunpack.c.h.b16 %v100
    %v186 = vunpack.c.l.b16 %v101
    %v187 = vunpack.c.h.b16 %v101
    %v188 = vunpack.c.l.b16 %v102
    %v189 = vunpack.c.h.b16 %v102
    %v190 = vunpack.c.l.b16 %v103
    %v191 = vunpack.c.h.b16 %v103
    %v192 = vunpack.c.l.b16 %v104
    %v193 = vunpack.c.h.b16 %v104
    %v194 = vpack.c.b16 %v148, %v146
    %v195 = vpack.c.b16 %v149, %v147
    %v196 = vpack.c.b16 %v152, %v150
    %v197 = vpack.c.b16 %v153, %v151
    %v198 = vpack.c.b16 %v156, %v154
    %v199 = vpack.c.b16 %v157, %v155
    %v200 = vpack.c.b16 %v160, %v158
    %v201 = vpack.c.b16 %v161, %v159
    %v202 = vpack.c.b16 %v164, %v162
    %v203 = vpack.c.b16 %v165, %v163
    %v204 = vpack.c.b16 %v168, %v166
    %v205 = vpack.c.b16 %v169, %v167
    %v206 = vpack.c.b16 %v172, %v170
    %v207 = vpack.c.b16 %v173, %v171
    %v208 = vpack.c.b16 %v176, %v174
    %v209 = vpack.c.b16 %v177, %v175
    %v210 = vpack.c.b16 %v180, %v178
    %v211 = vpack.c.b16 %v181, %v179
    %v212 = vpack.c.b16 %v184, %v182
    %v213 = vpack.c.b16 %v185, %v183
    %v214 = vpack.c.b16 %v188, %v186
    %v215 = vpack.c.b16 %v189, %v187
    %v216 = vpack.c.b16 %v192, %v190
    %v217 = vpack.c.b16 %v193, %v191
    %vm242 = vcmask 523264
    %v244 = vsel %vm242, %v120, 0
    %246 = vmatprep.subr.bf16.mxu0 %v195
    %247 = vmatpush1.bf16.msra.mxu0 %v194
    %248 = vmatprep.subr.bf16.mxu0 %v197
    %249 = vmatpush1.bf16.msra.mxu0 %v196
    %250 = vmatprep.subr.bf16.mxu0 %v199
    %251 = vmatpush1.bf16.msra.mxu0 %v198
    %252 = vmatprep.subr.bf16.mxu0 %v201
    %253 = vmatpush1.bf16.msra.mxu0 %v200
    %254 = vmatprep.subr.bf16.mxu0 %v203
    %255 = vmatpush1.bf16.msra.mxu0 %v202
    %256 = vmatprep.subr.bf16.mxu0 %v205
    %257 = vmatpush1.bf16.msra.mxu0 %v204
    %258 = vmatprep.subr.bf16.mxu0 %v207
    %259 = vmatpush1.bf16.msra.mxu0 %v206
    %260 = vmatprep.subr.bf16.mxu0 %v209
    %261 = vmatpush1.bf16.msra.mxu0 %v208
    %262 = vmatprep.subr.bf16.mxu0 %v211
    %263 = vmatpush1.bf16.msra.mxu0 %v210
    %264 = vmatprep.subr.bf16.mxu0 %v213
    %265 = vmatpush1.bf16.msra.mxu0 %v212
    %266 = vmatprep.subr.bf16.mxu0 %v215
    %267 = vmatpush1.bf16.msra.mxu0 %v214
    %268 = vmatprep.subr.bf16.mxu0 %v217
    %269 = vmatpush1.bf16.msra.mxu0 %v216
    %270 = vmatprep.subr.bf16.mxu0 0
    %271 = vmatpush1.bf16.msra.mxu0 0
    %272 = vmatprep.subr.bf16.mxu0 0
    %273 = vmatpush1.bf16.msra.mxu0 0
    %274 = vmatprep.subr.bf16.mxu0 0
    %275 = vmatpush1.bf16.msra.mxu0 0
    %276 = vmatprep.subr.bf16.mxu0 0
    %277 = vmatpush1.bf16.msra.mxu0 0
    %278 = vmatprep.mubr.bf16.mxu0 %v244
    %279 = vmatmul.mubr.bf16.gmra.mrb[0].mxu0 %v119
    %v280 = vpop.f32.mrb[0].mxu0
    %v281 = vadd.f32 %v108, %v280
    %v282 = vpop.f32.mrb[0].mxu0
    %v283 = vadd.f32 %v112, %v282
    %v284 = vpop.f32.mrb[0].mxu0
    %v285 = vadd.f32 %v108, %v284
    %v286 = vpop.f32.mrb[0].mxu0
    %v287 = vadd.f32 %v112, %v286
    %288 = vdwg.mxu0
    %v289 = vmax.f32 %v281, 0.0
    %v290 = vmax.f32 %v283, 0.0
    %v291 = vmax.f32 %v285, 0.0
    %v292 = vmax.f32 %v287, 0.0
    %v293 = vpack.c.bf16 %v291, %v289
    %v294 = vpack.c.bf16 %v292, %v290
    %v295 = vld [vmem:[%s2] sm:$0xf]
    %v296 = vld [vmem:[%s2 + $0x4] sm:$0xf]
    %v297 = vld [vmem:[%s2 + $0x8] sm:$0xf]
    %v298 = vld [vmem:[%s2 + $0xc] sm:$0xf]
    %v299 = vld [vmem:[%s2 + $0x10] sm:$0xf]
    %v300 = vld [vmem:[%s2 + $0x14] sm:$0xf]
    %v301 = vld [vmem:[%s2 + $0x18] sm:$0xf]
    %v302 = vld [vmem:[%s2 + $0x1c] sm:$0xf]
    %v303 = vld [vmem:[%s2 + $0x20] sm:$0xf]
    %v304 = vld [vmem:[%s2 + $0x24] sm:$0xf]
    %v305 = vld [vmem:[%s2 + $0x28] sm:$0xf]
    %v306 = vld [vmem:[%s2 + $0x2c] sm:$0xf]
    %v307 = vld [vmem:[%s2 + $0x30] sm:$0xf]
    %v308 = vld [vmem:[%s2 + $0x34] sm:$0xf]
    %v309 = vld [vmem:[%s2 + $0x38] sm:$0xf]
    %v310 = vld [vmem:[%s2 + $0x3c] sm:$0xf]
    %v311 = vld [vmem:[%s2 + $0x40] sm:$0xf]
    %v312 = vld [vmem:[%s2 + $0x44] sm:$0xf]
    %v313 = vld [vmem:[%s2 + $0x48] sm:$0xf]
    %v314 = vld [vmem:[%s2 + $0x4c] sm:$0xf]
    %v315 = vld [vmem:[%s2 + $0x50] sm:$0xf]
    %v316 = vld [vmem:[%s2 + $0x54] sm:$0xf]
    %v317 = vld [vmem:[%s2 + $0x58] sm:$0xf]
    %v318 = vld [vmem:[%s2 + $0x5c] sm:$0xf]
    %v319 = vld [vmem:[%s2 + $0x60] sm:$0xf]
    %v320 = vld [vmem:[%s2 + $0x64] sm:$0xf]
    %v321 = vld [vmem:[%s2 + $0x68] sm:$0xf]
    %v322 = vld [vmem:[%s2 + $0x6c] sm:$0xf]
    %v323 = vld [vmem:[%s2 + $0x70] sm:$0xf]
    %v324 = vld [vmem:[%s2 + $0x74] sm:$0xf]
    %v325 = vld [vmem:[%s2 + $0x78] sm:$0xf]
    %v326 = vld [vmem:[%s2 + $0x7c] sm:$0xf]
    %v327 = vlaneseq
    %v328 = vshrl.u32 %v327, 7
    %v329 = vsub.s32 1, %v328
    %v330 = vrot.slane %v77, %v329
    %v363 = vunpack.c.l.b16 %v295
    %v364 = vunpack.c.l.b16 %v296
    %v365 = vunpack.c.l.b16 %v297
    %v366 = vunpack.c.l.b16 %v298
    %v367 = vunpack.c.l.b16 %v299
    %v368 = vunpack.c.l.b16 %v300
    %v369 = vunpack.c.l.b16 %v301
    %v370 = vunpack.c.l.b16 %v302
    %v371 = vunpack.c.l.b16 %v303
    %v372 = vunpack.c.l.b16 %v304
    %v373 = vunpack.c.l.b16 %v305
    %v374 = vunpack.c.l.b16 %v306
    %v375 = vunpack.c.l.b16 %v307
    %v376 = vunpack.c.l.b16 %v308
    %v377 = vunpack.c.l.b16 %v309
    %v378 = vunpack.c.l.b16 %v310
    %v379 = vunpack.c.l.b16 %v311
    %v380 = vunpack.c.l.b16 %v312
    %v381 = vunpack.c.l.b16 %v313
    %v382 = vunpack.c.l.b16 %v314
    %v383 = vunpack.c.l.b16 %v315
    %v384 = vunpack.c.l.b16 %v316
    %v385 = vunpack.c.l.b16 %v317
    %v386 = vunpack.c.l.b16 %v318
    %v387 = vunpack.c.l.b16 %v319
    %v388 = vunpack.c.l.b16 %v320
    %v389 = vunpack.c.l.b16 %v321
    %v390 = vunpack.c.l.b16 %v322
    %v391 = vunpack.c.l.b16 %v323
    %v392 = vunpack.c.l.b16 %v324
    %v393 = vunpack.c.l.b16 %v325
    %v394 = vunpack.c.l.b16 %v326
    %v395 = vpack.c.b16 %v364, %v363
    %v396 = vpack.c.b16 %v366, %v365
    %v397 = vpack.c.b16 %v368, %v367
    %v398 = vpack.c.b16 %v370, %v369
    %v399 = vpack.c.b16 %v372, %v371
    %v400 = vpack.c.b16 %v374, %v373
    %v401 = vpack.c.b16 %v376, %v375
    %v402 = vpack.c.b16 %v378, %v377
    %v403 = vpack.c.b16 %v380, %v379
    %v404 = vpack.c.b16 %v382, %v381
    %v405 = vpack.c.b16 %v384, %v383
    %v406 = vpack.c.b16 %v386, %v385
    %v407 = vpack.c.b16 %v388, %v387
    %v408 = vpack.c.b16 %v390, %v389
    %v409 = vpack.c.b16 %v392, %v391
    %v410 = vpack.c.b16 %v394, %v393
    %427 = vmatprep.subr.bf16.mxu0 0
    %428 = vmatpush1.bf16.msra.mxu0 %v395
    %429 = vmatprep.subr.bf16.mxu0 0
    %430 = vmatpush1.bf16.msra.mxu0 %v396
    %431 = vmatprep.subr.bf16.mxu0 0
    %432 = vmatpush1.bf16.msra.mxu0 %v397
    %433 = vmatprep.subr.bf16.mxu0 0
    %434 = vmatpush1.bf16.msra.mxu0 %v398
    %435 = vmatprep.subr.bf16.mxu0 0
    %436 = vmatpush1.bf16.msra.mxu0 %v399
    %437 = vmatprep.subr.bf16.mxu0 0
    %438 = vmatpush1.bf16.msra.mxu0 %v400
    %439 = vmatprep.subr.bf16.mxu0 0
    %440 = vmatpush1.bf16.msra.mxu0 %v401
    %441 = vmatprep.subr.bf16.mxu0 0
    %442 = vmatpush1.bf16.msra.mxu0 %v402
    %443 = vmatprep.subr.bf16.mxu0 0
    %444 = vmatpush1.bf16.msra.mxu0 %v403
    %445 = vmatprep.subr.bf16.mxu0 0
    %446 = vmatpush1.bf16.msra.mxu0 %v404
    %447 = vmatprep.subr.bf16.mxu0 0
    %448 = vmatpush1.bf16.msra.mxu0 %v405
    %449 = vmatprep.subr.bf16.mxu0 0
    %450 = vmatpush1.bf16.msra.mxu0 %v406
    %451 = vmatprep.subr.bf16.mxu0 0
    %452 = vmatpush1.bf16.msra.mxu0 %v407
    %453 = vmatprep.subr.bf16.mxu0 0
    %454 = vmatpush1.bf16.msra.mxu0 %v408
    %455 = vmatprep.subr.bf16.mxu0 0
    %456 = vmatpush1.bf16.msra.mxu0 %v409
    %457 = vmatprep.subr.bf16.mxu0 0
    %458 = vmatpush1.bf16.msra.mxu0 %v410
    %459 = vmatprep.mubr.bf16.mxu0 %v294
    %460 = vmatmul.mubr.bf16.gmra.mrb[0].mxu0 %v293
    %v461 = vpop.f32.mrb[0].mxu0
    %v462 = vadd.f32 %v330, %v461
    %v463 = vpop.f32.mrb[0].mxu0
    %v464 = vpop.f32.mrb[0].mxu0
    %v465 = vadd.f32 %v330, %v464
    %v466 = vpop.f32.mrb[0].mxu0
    %467 = vdwg.mxu0
    %v468 = vmax.f32 %v462, 0.0
    %v469 = vmax.f32 %v465, 0.0
    %v470 = vpack.c.bf16 %v469, %v468
    %v471 = vld [vmem:[#allocation4] sm:$0xf]
    %v472 = vld [vmem:[#allocation4 + $0x4] sm:$0xf]
    %v473 = vld [vmem:[#allocation4 + $0x8] sm:$0xf]
    %v474 = vld [vmem:[#allocation4 + $0xc] sm:$0xf]
    %v475 = vld [vmem:[#allocation4 + $0x10] sm:$0xf]
    %v476 = vld [vmem:[#allocation4 + $0x14] sm:$0xf]
    %v477 = vld [vmem:[#allocation4 + $0x18] sm:$0xf]
    %v478 = vld [vmem:[#allocation4 + $0x1c] sm:$0xf]
    %v479 = vld [vmem:[#allocation4 + $0x20] sm:$0xf]
    %v480 = vld [vmem:[#allocation4 + $0x24] sm:$0xf]
    %v481 = vld [vmem:[#allocation4 + $0x28] sm:$0xf]
    %v482 = vld [vmem:[#allocation4 + $0x2c] sm:$0xf]
    %v483 = vld [vmem:[#allocation4 + $0x30] sm:$0xf]
    %v484 = vld [vmem:[#allocation4 + $0x34] sm:$0xf]
    %v485 = vld [vmem:[#allocation4 + $0x38] sm:$0xf]
    %v486 = vld [vmem:[#allocation4 + $0x3c] sm:$0xf]
    %v487 = vlaneseq
    %v488 = vshrl.u32 %v487, 7
    %v489 = vsub.s32 2, %v488
    %v490 = vrot.slane %v77, %v489
    %v507 = vunpack.c.l.b16 %v471
    %v508 = vunpack.c.l.b16 %v472
    %v509 = vunpack.c.l.b16 %v473
    %v510 = vunpack.c.l.b16 %v474
    %v511 = vunpack.c.l.b16 %v475
    %v512 = vunpack.c.l.b16 %v476
    %v513 = vunpack.c.l.b16 %v477
    %v514 = vunpack.c.l.b16 %v478
    %v515 = vunpack.c.l.b16 %v479
    %v516 = vunpack.c.l.b16 %v480
    %v517 = vunpack.c.l.b16 %v481
    %v518 = vunpack.c.l.b16 %v482
    %v519 = vunpack.c.l.b16 %v483
    %v520 = vunpack.c.l.b16 %v484
    %v521 = vunpack.c.l.b16 %v485
    %v522 = vunpack.c.l.b16 %v486
    %v523 = vpack.c.b16 %v508, %v507
    %v524 = vpack.c.b16 %v510, %v509
    %v525 = vpack.c.b16 %v512, %v511
    %v526 = vpack.c.b16 %v514, %v513
    %v527 = vpack.c.b16 %v516, %v515
    %v528 = vpack.c.b16 %v518, %v517
    %v529 = vpack.c.b16 %v520, %v519
    %v530 = vpack.c.b16 %v522, %v521
    %539 = vmatprep.subr.bf16.mxu0 0
    %540 = vmatpush1.bf16.msra.mxu0 %v523
    %541 = vmatprep.subr.bf16.mxu0 0
    %542 = vmatpush1.bf16.msra.mxu0 %v524
    %543 = vmatprep.subr.bf16.mxu0 0
    %544 = vmatpush1.bf16.msra.mxu0 %v525
    %545 = vmatprep.subr.bf16.mxu0 0
    %546 = vmatpush1.bf16.msra.mxu0 %v526
    %547 = vmatprep.subr.bf16.mxu0 0
    %548 = vmatpush1.bf16.msra.mxu0 %v527
    %549 = vmatprep.subr.bf16.mxu0 0
    %550 = vmatpush1.bf16.msra.mxu0 %v528
    %551 = vmatprep.subr.bf16.mxu0 0
    %552 = vmatpush1.bf16.msra.mxu0 %v529
    %553 = vmatprep.subr.bf16.mxu0 0
    %554 = vmatpush1.bf16.msra.mxu0 %v530
    %555 = vmatprep.subr.bf16.mxu0 0
    %556 = vmatpush1.bf16.msra.mxu0 0
    %557 = vmatprep.subr.bf16.mxu0 0
    %558 = vmatpush1.bf16.msra.mxu0 0
    %559 = vmatprep.subr.bf16.mxu0 0
    %560 = vmatpush1.bf16.msra.mxu0 0
    %561 = vmatprep.subr.bf16.mxu0 0
    %562 = vmatpush1.bf16.msra.mxu0 0
    %563 = vmatprep.subr.bf16.mxu0 0
    %564 = vmatpush1.bf16.msra.mxu0 0
    %565 = vmatprep.subr.bf16.mxu0 0
    %566 = vmatpush1.bf16.msra.mxu0 0
    %567 = vmatprep.subr.bf16.mxu0 0
    %568 = vmatpush1.bf16.msra.mxu0 0
    %569 = vmatprep.subr.bf16.mxu0 0
    %570 = vmatpush1.bf16.msra.mxu0 0
    %571 = vmatprep.mubr.bf16.mxu0 0
    %572 = vmatmul.mubr.bf16.gmra.mrb[0].mxu0 %v470
    %v573 = vpop.f32.mrb[0].mxu0
    %v574 = vadd.f32 %v490, %v573
    %v575 = vpop.f32.mrb[0].mxu0
    %v576 = vpop.f32.mrb[0].mxu0
    %v577 = vadd.f32 %v490, %v576
    %v578 = vpop.f32.mrb[0].mxu0
    %579 = vdwg.mxu0
    %v580 = vmax.f32 %v574, 0.0
    %v581 = vmax.f32 %v577, 0.0
    %v582 = vpack.c.bf16 %v581, %v580
    %v583 = vld [vmem:[#allocation6] sm:$0xf]
    %v584 = vld [vmem:[#allocation6 + $0x4] sm:$0xf]
    %v585 = vld [vmem:[#allocation6 + $0x8] sm:$0xf]
    %v586 = vld [vmem:[#allocation6 + $0xc] sm:$0xf]
    %v587 = vld [vmem:[#allocation6 + $0x10] sm:$0xf]
    %v588 = vld [vmem:[#allocation6 + $0x14] sm:$0xf]
    %v589 = vld [vmem:[#allocation6 + $0x18] sm:$0xf]
    %v590 = vld [vmem:[#allocation6 + $0x1c] sm:$0xf]
    %v591 = vld [vmem:[#allocation6 + $0x20] sm:$0xf]
    %v592 = vld [vmem:[#allocation6 + $0x24] sm:$0xf]
    %v593 = vld [vmem:[#allocation6 + $0x28] sm:$0xf]
    %v594 = vld [vmem:[#allocation6 + $0x2c] sm:$0xf]
    %v595 = vld [vmem:[#allocation6 + $0x30] sm:$0xf]
    %v596 = vld [vmem:[#allocation6 + $0x34] sm:$0xf]
    %v597 = vld [vmem:[#allocation6 + $0x38] sm:$0xf]
    %v598 = vld [vmem:[#allocation6 + $0x3c] sm:$0xf]
    %v599 = vlaneseq
    %v600 = vshrl.u32 %v599, 7
    %v601 = vsub.s32 3, %v600
    %v602 = vrot.slane %v77, %v601
    %v619 = vunpack.c.l.b16 %v583
    %v620 = vunpack.c.l.b16 %v584
    %v621 = vunpack.c.l.b16 %v585
    %v622 = vunpack.c.l.b16 %v586
    %v623 = vunpack.c.l.b16 %v587
    %v624 = vunpack.c.l.b16 %v588
    %v625 = vunpack.c.l.b16 %v589
    %v626 = vunpack.c.l.b16 %v590
    %v627 = vunpack.c.l.b16 %v591
    %v628 = vunpack.c.l.b16 %v592
    %v629 = vunpack.c.l.b16 %v593
    %v630 = vunpack.c.l.b16 %v594
    %v631 = vunpack.c.l.b16 %v595
    %v632 = vunpack.c.l.b16 %v596
    %v633 = vunpack.c.l.b16 %v597
    %v634 = vunpack.c.l.b16 %v598
    %v635 = vpack.c.b16 %v620, %v619
    %v636 = vpack.c.b16 %v622, %v621
    %v637 = vpack.c.b16 %v624, %v623
    %v638 = vpack.c.b16 %v626, %v625
    %v639 = vpack.c.b16 %v628, %v627
    %v640 = vpack.c.b16 %v630, %v629
    %v641 = vpack.c.b16 %v632, %v631
    %v642 = vpack.c.b16 %v634, %v633
    %651 = vmatprep.subr.bf16.mxu0 0
    %652 = vmatpush1.bf16.msra.mxu0 %v635
    %653 = vmatprep.subr.bf16.mxu0 0
    %654 = vmatpush1.bf16.msra.mxu0 %v636
    %655 = vmatprep.subr.bf16.mxu0 0
    %656 = vmatpush1.bf16.msra.mxu0 %v637
    %657 = vmatprep.subr.bf16.mxu0 0
    %658 = vmatpush1.bf16.msra.mxu0 %v638
    %659 = vmatprep.subr.bf16.mxu0 0
    %660 = vmatpush1.bf16.msra.mxu0 %v639
    %661 = vmatprep.subr.bf16.mxu0 0
    %662 = vmatpush1.bf16.msra.mxu0 %v640
    %663 = vmatprep.subr.bf16.mxu0 0
    %664 = vmatpush1.bf16.msra.mxu0 %v641
    %665 = vmatprep.subr.bf16.mxu0 0
    %666 = vmatpush1.bf16.msra.mxu0 %v642
    %667 = vmatprep.subr.bf16.mxu0 0
    %668 = vmatpush1.bf16.msra.mxu0 0
    %669 = vmatprep.subr.bf16.mxu0 0
    %670 = vmatpush1.bf16.msra.mxu0 0
    %671 = vmatprep.subr.bf16.mxu0 0
    %672 = vmatpush1.bf16.msra.mxu0 0
    %673 = vmatprep.subr.bf16.mxu0 0
    %674 = vmatpush1.bf16.msra.mxu0 0
    %675 = vmatprep.subr.bf16.mxu0 0
    %676 = vmatpush1.bf16.msra.mxu0 0
    %677 = vmatprep.subr.bf16.mxu0 0
    %678 = vmatpush1.bf16.msra.mxu0 0
    %679 = vmatprep.subr.bf16.mxu0 0
    %680 = vmatpush1.bf16.msra.mxu0 0
    %681 = vmatprep.subr.bf16.mxu0 0
    %682 = vmatpush1.bf16.msra.mxu0 0
    %683 = vmatprep.mubr.bf16.mxu0 0
    %684 = vmatmul.mubr.bf16.gmra.mrb[0].mxu0 %v582
    %v685 = vpop.f32.mrb[0].mxu0
    %v686 = vadd.f32 %v602, %v685
    %v687 = vpop.f32.mrb[0].mxu0
    %v688 = vpop.f32.mrb[0].mxu0
    %v689 = vadd.f32 %v602, %v688
    %v690 = vpop.f32.mrb[0].mxu0
    %691 = vdwg.mxu0
    %v692 = vlaneseq
    %v693 = vand.u32 %v692, 127
    %vm694 = vcmp.ge.s32.totalorder %v693, 32
    %vm695 = vcmp.lt.s32.totalorder %v693, 35
    %vm696 = vmand %vm694, %vm695
    %v697 = vsel %vm696, %v686, -inf
    %v698 = vsel %vm696, %v689, -inf
    %699 = vmax.xlane.f32.xlu0 %v697
    %v700 = vpop.xlane.xlu0 %699
    %701 = vmax.xlane.f32.xlu0 %v698
    %v702 = vpop.xlane.xlu0 %701
    %v703 = vsub.f32 %v697, %v700
    %v704 = vsub.f32 %v698, %v702
    %v705 = vmul.f32 %v703, 1.442695
    %v706 = vpow.pop %v705
    %v707 = vmul.f32 %v704, 1.442695
    %v708 = vpow.pop %v707
    %709 = vadd.xlane.f32.xlu0 %v706
    %v710 = vpop.xlane.xlu0 %709
    %711 = vadd.xlane.f32.xlu0 %v708
    %v712 = vpop.xlane.xlu0 %711
    %v713 = vlog2.pop %v710
    %v714 = vmul.f32 %v713, 0.6931472
    %v715 = vlog2.pop %v712
    %v716 = vmul.f32 %v715, 0.6931472
    %v717 = vsub.f32 %v703, %v714
    %v718 = vsub.f32 %v704, %v716
    %v719 = vsel %vm696, %v717, %v686
    %v720 = vsel %vm696, %v718, %v689
    %721 = vst [vmem:[%s6] sm:$0xff] %v719
    %722 = vst [vmem:[%s6 + $0x8] sm:$0xff] %v720
    // Predicated region
    $region42: #{bcq_conv_forward.1} parent=1 // pred_check
      _
    $region43: #{bcq_conv_forward.1} parent=1 // pred_check_branch
      %724 = sbr.rel (0) target = $region45
    $region44: #{bcq_conv_forward.1} parent=1 // pred_region
      _
    $region45: #{bcq_conv_forward.1} parent=1 // pred_fallthru
      _
    // Predicated region
    $region46: #{bcq_conv_forward.1} parent=1 // pred_check
      _
    $region47: #{bcq_conv_forward.1} parent=1 // pred_check_branch
      %726 = sbr.rel (0) target = $region49
    $region48: #{bcq_conv_forward.1} parent=1 // pred_region
      _
    $region49: #{bcq_conv_forward.1} parent=1 // pred_fallthru
      _
    %727 = vsyncpa [#allocation3], 1
    %728 = vsyncpa [#allocation5], 1
    %729 = vsyncpa [#allocation8], 1

</llo_original>
